<compile_context>
chip_gen: v7x
topology: tpu7x:2x2x1
jax: 0.10.0
libtpu: 0.0.40
codegen_flags: <defaults>
</compile_context>

<pallas_src>
import functools

import jax
import jax.numpy as jnp
import numpy as np
from jax import lax
from jax.experimental import pallas as pl
from jax.experimental.pallas import tpu as pltpu

SCALES = 4            # module default
MOM_ROWS = 8          # rows 0..4: a00, a01, a11, b0, b1   (padded to 8 sublanes)
OUT_ROWS = 16         # row 0: data num; 1..4: reg num; 5..8: reg den; 9: a11 (fused only)
VMEM_LIMIT_BYTES = 48 * 1024 * 1024
FUSED_VMEM_BUDGET = 40 * 1024 * 1024
TILE_VMEM_BUDGET = 40 * 1024 * 1024


# =============================== fused single-pass kernel ===========================
def _fused_kernel(pred_ref, tgt_ref, out_ref, diff_scr, mask_scr):
    p = pred_ref[0].astype(jnp.float32)          # (Hp, W) — cast in-register
    t = tgt_ref[0].astype(jnp.float32)
    Hp, W = p.shape
    m = (t > 0.0).astype(jnp.float32)

    # per-image Gram moments (compute_scale_and_shift)
    mp = m * p
    a00 = jnp.sum(mp * p)
    a01 = jnp.sum(mp)
    a11 = jnp.sum(m)
    b0 = jnp.sum(mp * t)
    b1 = jnp.sum(m * t)

    det = a00 * a11 - a01 * a01
    valid = det > 0.0
    det_s = jnp.where(valid, det, 1.0)
    x0 = jnp.where(valid, (a11 * b0 - a01 * b1) / det_s, 0.0)   # scale
    x1 = jnp.where(valid, (a00 * b1 - a01 * b0) / det_s, 0.0)   # shift

    res = x0 * p + x1 - t                        # prediction_ssi - target
    diff = m * res
    data_num = jnp.sum(diff * res)               # = sum(mask * res * res)

    # stash f32 diff/mask so coarse scales can re-read with sublane stride
    diff_scr[...] = diff
    mask_scr[...] = m

    ciota = lax.broadcasted_iota(jnp.int32, (1, W), 1)

    reg_num = []
    reg_den = []
    for s in range(SCALES):
        step = 1 << s
        if step == 1:
            d_s, m_s, Hs = diff, m, Hp
            csel = None
            den = a11
        else:
            Hs = Hp // step
            d_s = diff_scr[pl.ds(0, Hs, stride=step), :]   # row-subsampled slab
            m_s = mask_scr[pl.ds(0, Hs, stride=step), :]
            csel = ((ciota & (step - 1)) == 0).astype(jnp.float32)   # column selector
            den = jnp.sum(m_s * csel)
        num = jnp.float32(0.0)
        if W > step:                              # grad along W
            gx = (jnp.abs(d_s[:, step:] - d_s[:, :W - step])
                  * m_s[:, :W - step] * m_s[:, step:])
            if csel is not None:
                gx = gx * csel[:, :W - step]
            num = num + jnp.sum(gx)
        if Hs > 1:                                # grad along H (whole image, no halo)
            gy = (jnp.abs(d_s[1:, :] - d_s[:-1, :])
                  * m_s[:-1, :] * m_s[1:, :])
            if csel is not None:
                gy = gy * csel
            num = num + jnp.sum(gy)
        reg_num.append(num)
        reg_den.append(den)

    row = lax.broadcasted_iota(jnp.int32, (1, OUT_ROWS, 128), 1)
    contrib = jnp.where(row == 0, data_num, 0.0)
    contrib = contrib + jnp.where(row == 1 + 2 * SCALES, a11, 0.0)
    for s in range(SCALES):
        contrib = contrib + jnp.where(row == 1 + s, reg_num[s], 0.0)
        contrib = contrib + jnp.where(row == 1 + SCALES + s, reg_den[s], 0.0)
    out_ref[...] = contrib


# =========================== tiled fallback: pass 1 (moments) =======================
def _moments_kernel(pred_ref, tgt_ref, out_ref):
    h = pl.program_id(1)
    p = pred_ref[0].astype(jnp.float32)          # (TH, W)
    t = tgt_ref[0].astype(jnp.float32)
    m = (t > 0.0).astype(jnp.float32)
    mp = m * p

    a00 = jnp.sum(mp * p)
    a01 = jnp.sum(mp)
    a11 = jnp.sum(m)
    b0 = jnp.sum(mp * t)
    b1 = jnp.sum(m * t)

    row = lax.broadcasted_iota(jnp.int32, (1, MOM_ROWS, 128), 1)
    contrib = (jnp.where(row == 0, a00, 0.0)
               + jnp.where(row == 1, a01, 0.0)
               + jnp.where(row == 2, a11, 0.0)
               + jnp.where(row == 3, b0, 0.0)
               + jnp.where(row == 4, b1, 0.0))

    @pl.when(h == 0)
    def _():
        out_ref[...] = jnp.zeros_like(out_ref)

    out_ref[...] += contrib


# ======================== tiled fallback: pass 2 (data + gradients) =================
def _loss_kernel(pred_ref, tgt_ref, mom_ref, out_ref, cdiff_ref, cmask_ref):
    h = pl.program_id(1)
    p = pred_ref[0].astype(jnp.float32)          # (TH, W)
    t = tgt_ref[0].astype(jnp.float32)
    TH, W = p.shape
    m = (t > 0.0).astype(jnp.float32)

    # closed-form scale/shift from the per-image moments
    mom = mom_ref[0]                             # (MOM_ROWS, 128); each row = scalar splat
    a00 = mom[0:1, 0:1]
    a01 = mom[1:2, 0:1]
    a11 = mom[2:3, 0:1]
    b0 = mom[3:4, 0:1]
    b1 = mom[4:5, 0:1]
    det = a00 * a11 - a01 * a01
    valid = det > 0.0
    det_s = jnp.where(valid, det, 1.0)
    x0 = jnp.where(valid, (a11 * b0 - a01 * b1) / det_s, 0.0)
    x1 = jnp.where(valid, (a00 * b1 - a01 * b0) / det_s, 0.0)

    res = x0 * p + x1 - t
    diff = m * res
    data_num = jnp.sum(diff * res)

    # h == 0: reset accumulator and zero the carried halo (so the straddle terms
    # below contribute exactly 0 for the first tile of every image) -> single
    # out_ref accumulation per step.
    @pl.when(h == 0)
    def _():
        out_ref[...] = jnp.zeros_like(out_ref)
        cdiff_ref[...] = jnp.zeros_like(cdiff_ref)
        cmask_ref[...] = jnp.zeros_like(cmask_ref)

    riota = lax.broadcasted_iota(jnp.int32, (TH, 1), 0)
    ciota = lax.broadcasted_iota(jnp.int32, (1, W), 1)
    d_top = diff[0:1, :]
    m_top = m[0:1, :]

    reg_num = []
    reg_den = []
    for s in range(SCALES):
        step = 1 << s
        if step == 1:
            msel = m
            csel = None
        else:
            rsel = ((riota & (step - 1)) == 0).astype(jnp.float32)
            csel = ((ciota & (step - 1)) == 0).astype(jnp.float32)
            msel = (m * rsel) * csel             # subsampled-and-valid selector
        den = jnp.sum(msel)
        num = jnp.float32(0.0)
        if W > step:                              # grad along W (no halo needed)
            gx = (jnp.abs(diff[:, step:] - diff[:, :W - step])
                  * msel[:, :W - step] * msel[:, step:])
            num = num + jnp.sum(gx)
        if TH > step:                             # grad along H, pairs inside this tile
            gy = (jnp.abs(diff[step:, :] - diff[:TH - step, :])
                  * msel[:TH - step, :] * msel[step:, :])
            num = num + jnp.sum(gy)
        # grad_y pair straddling the tile boundary: global rows (h*TH - step, h*TH);
        # carries are zero at h == 0 so this is exactly neutral there.
        d_prev = cdiff_ref[8 - step:9 - step, :]
        m_prev = cmask_ref[8 - step:9 - step, :]
        g = jnp.abs(d_top - d_prev) * m_top * m_prev
        if csel is not None:
            g = g * csel
        num = num + jnp.sum(g)
        reg_num.append(num)
        reg_den.append(den)

    row = lax.broadcasted_iota(jnp.int32, (1, OUT_ROWS, 128), 1)
    contrib = jnp.where(row == 0, data_num, 0.0)
    for s in range(SCALES):
        contrib = contrib + jnp.where(row == 1 + s, reg_num[s], 0.0)
        contrib = contrib + jnp.where(row == 1 + SCALES + s, reg_den[s], 0.0)
    out_ref[...] += contrib

    # carry the last 8 rows of this tile for the next tile's straddle terms
    cdiff_ref[...] = diff[TH - 8:, :]
    cmask_ref[...] = m[TH - 8:, :]


# ------------------------------------ helpers ---------------------------------------
def _keep_supported_dtype(x):
    # Stream f32/bf16/f16 in their native dtype (cast to f32 inside the kernel);
    # anything else falls back to an f32 wrapper cast.
    if x.dtype in (jnp.float32, jnp.bfloat16, jnp.float16):
        return x
    return x.astype(jnp.float32)


def _combine(data_num, a11, reg_num, reg_den, alpha):
    """O(B) batch-based reduction from per-image partial sums."""
    data_div = 2.0 * jnp.sum(a11)
    total = jnp.where(data_div == 0, 0.0,
                      jnp.sum(data_num) / jnp.where(data_div == 0, 1.0, data_div))
    if alpha > 0:
        num = jnp.sum(reg_num, axis=0)           # (SCALES,)
        den = jnp.sum(reg_den, axis=0)
        reg = jnp.sum(jnp.where(den == 0, 0.0, num / jnp.where(den == 0, 1.0, den)))
        total = total + alpha * reg
    return total


# ------------------------------------ fused path ------------------------------------
def _midas_loss_fused(prediction, target, alpha):
    B, H, W = prediction.shape
    gran = max(8, 32 // min(prediction.dtype.itemsize, target.dtype.itemsize))
    Hp = ((H + gran - 1) // gran) * gran
    if Hp != H:
        # zero padding => mask == 0 on padded rows, exactly neutral for every sum
        prediction = jnp.pad(prediction, ((0, 0), (0, Hp - H), (0, 0)))
        target = jnp.pad(target, ((0, 0), (0, Hp - H), (0, 0)))

    out = pl.pallas_call(
        _fused_kernel,
        out_shape=jax.ShapeDtypeStruct((B, OUT_ROWS, 128), jnp.float32),
        grid_spec=pltpu.PrefetchScalarGridSpec(
            num_scalar_prefetch=0,
            grid=(B,),
            in_specs=[pl.BlockSpec((1, Hp, W), lambda b: (b, 0, 0)),
                      pl.BlockSpec((1, Hp, W), lambda b: (b, 0, 0))],
            out_specs=pl.BlockSpec((1, OUT_ROWS, 128), lambda b: (b, 0, 0)),
            scratch_shapes=[pltpu.VMEM((Hp, W), jnp.float32),    # diff
                            pltpu.VMEM((Hp, W), jnp.float32)]),  # mask
        compiler_params=pltpu.CompilerParams(
            dimension_semantics=("parallel",),
            vmem_limit_bytes=VMEM_LIMIT_BYTES),
    )(prediction, target)

    data_num = out[:, 0, 0]
    a11 = out[:, 1 + 2 * SCALES, 0]
    reg_num = out[:, 1:1 + SCALES, 0]
    reg_den = out[:, 1 + SCALES:1 + 2 * SCALES, 0]
    return _combine(data_num, a11, reg_num, reg_den, alpha)


# ------------------------------------ tiled path ------------------------------------
def _midas_loss_tiled(prediction, target, alpha, row_tile):
    B, H, W = prediction.shape
    itemsize = min(prediction.dtype.itemsize, target.dtype.itemsize)
    gran = max(8, 32 // itemsize)                # 8 for f32, 16 for bf16/f16

    # VMEM-budget-aware row-tile cap (2 inputs x 2 buffers + ~8 f32 temporaries/row)
    per_row = W * (4 * itemsize + 8 * 4)
    cap = max(gran, min(int(row_tile), TILE_VMEM_BUDGET // max(per_row, 1)))
    cap = max(gran, (cap // gran) * gran)
    H8 = ((H + gran - 1) // gran) * gran
    cap = max(gran, min(cap, H8))
    best = None
    for cand in range(gran, cap + 1, gran):
        waste = ((H + cand - 1) // cand) * cand - H
        if best is None or waste < best[0] or (waste == best[0] and cand > best[1]):
            best = (waste, cand)
    th = best[1]
    assert th % 8 == 0 and (1 << (SCALES - 1)) <= 8  # halo carry assumes step<=8, 8|th

    Hp = ((H + th - 1) // th) * th
    if Hp != H:
        prediction = jnp.pad(prediction, ((0, 0), (0, Hp - H), (0, 0)))
        target = jnp.pad(target, ((0, 0), (0, Hp - H), (0, 0)))
    nh = Hp // th

    cparams = pltpu.CompilerParams(
        dimension_semantics=("parallel", "arbitrary"),
        vmem_limit_bytes=VMEM_LIMIT_BYTES)

    # pass 1: per-image moments
    moments = pl.pallas_call(
        _moments_kernel,
        out_shape=jax.ShapeDtypeStruct((B, MOM_ROWS, 128), jnp.float32),
        grid_spec=pltpu.PrefetchScalarGridSpec(
            num_scalar_prefetch=0,
            grid=(B, nh),
            in_specs=[pl.BlockSpec((1, th, W), lambda b, h: (b, h, 0)),
                      pl.BlockSpec((1, th, W), lambda b, h: (b, h, 0))],
            out_specs=pl.BlockSpec((1, MOM_ROWS, 128), lambda b, h: (b, 0, 0))),
        compiler_params=cparams,
    )(prediction, target)

    # pass 2: per-image partial loss sums
    parts = pl.pallas_call(
        _loss_kernel,
        out_shape=jax.ShapeDtypeStruct((B, OUT_ROWS, 128), jnp.float32),
        grid_spec=pltpu.PrefetchScalarGridSpec(
            num_scalar_prefetch=0,
            grid=(B, nh),
            in_specs=[pl.BlockSpec((1, th, W), lambda b, h: (b, h, 0)),
                      pl.BlockSpec((1, th, W), lambda b, h: (b, h, 0)),
                      pl.BlockSpec((1, MOM_ROWS, 128), lambda b, h: (b, 0, 0))],
            out_specs=pl.BlockSpec((1, OUT_ROWS, 128), lambda b, h: (b, 0, 0)),
            scratch_shapes=[pltpu.VMEM((8, W), jnp.float32),
                            pltpu.VMEM((8, W), jnp.float32)]),
        compiler_params=cparams,
    )(prediction, target, moments)

    data_num = parts[:, 0, 0]
    a11 = moments[:, 2, 0]
    reg_num = parts[:, 1:1 + SCALES, 0]
    reg_den = parts[:, 1 + SCALES:1 + 2 * SCALES, 0]
    return _combine(data_num, a11, reg_num, reg_den, alpha)


# ------------------------------------- wrapper --------------------------------------
def midas_loss(prediction, target, alpha=0.5, row_tile=512, force_tiled=False):
    """Forward pass of MidasLoss (alpha=0.5, scales=4, batch-based, disparity=False)."""
    # TODO(synk): disparity=True branch (1/target + normalize_batch_zero_one) and the
    # 'image-based' reduction option are not implemented (module defaults only).
    if prediction.ndim == 4:
        prediction = jnp.squeeze(prediction, axis=1)
        target = jnp.squeeze(target, axis=1)
    prediction = _keep_supported_dtype(prediction)
    target = _keep_supported_dtype(target)
    B, H, W = prediction.shape

    # fused single-pass path whenever one image comfortably fits in VMEM
    itemsize = max(prediction.dtype.itemsize, target.dtype.itemsize)
    est_fused = H * W * (4 * itemsize + 12 * 4)  # 2 in x 2 bufs + scratch/temporaries
    if (not force_tiled) and est_fused <= FUSED_VMEM_BUDGET:
        return _midas_loss_fused(prediction, target, alpha)
    return _midas_loss_tiled(prediction, target, alpha, row_tile)


# ------------------ pure-JAX reference mirroring the PyTorch module ------------------
def _reference_midas_loss(prediction, target, alpha=0.5, scales=SCALES):
    if prediction.ndim == 4:
        prediction = jnp.squeeze(prediction, axis=1)
        target = jnp.squeeze(target, axis=1)
    prediction = prediction.astype(jnp.float32)
    target = target.astype(jnp.float32)
    mask = (target > 0).astype(jnp.float32)

    a00 = jnp.sum(mask * prediction * prediction, (1, 2))
    a01 = jnp.sum(mask * prediction, (1, 2))
    a11 = jnp.sum(mask, (1, 2))
    b0 = jnp.sum(mask * prediction * target, (1, 2))
    b1 = jnp.sum(mask * target, (1, 2))
    det = a00 * a11 - a01 * a01
    valid = det > 0
    det_s = jnp.where(valid, det, 1.0)
    x0 = jnp.where(valid, (a11 * b0 - a01 * b1) / det_s, 0.0)
    x1 = jnp.where(valid, (-a01 * b0 + a00 * b1) / det_s, 0.0)
    pssi = x0[:, None, None] * prediction + x1[:, None, None]

    res = pssi - target
    img = jnp.sum(mask * res * res, (1, 2))
    div = jnp.sum(2.0 * a11)
    total = jnp.where(div == 0, 0.0, jnp.sum(img) / jnp.where(div == 0, 1.0, div))

    def grad_loss(step):
        p = pssi[:, ::step, ::step]
        t = target[:, ::step, ::step]
        m = mask[:, ::step, ::step]
        M = jnp.sum(m, (1, 2))
        d = m * (p - t)
        gx = jnp.abs(d[:, :, 1:] - d[:, :, :-1]) * m[:, :, 1:] * m[:, :, :-1]
        gy = jnp.abs(d[:, 1:, :] - d[:, :-1, :]) * m[:, 1:, :] * m[:, :-1, :]
        il = jnp.sum(gx, (1, 2)) + jnp.sum(gy, (1, 2))
        dv = jnp.sum(M)
        return jnp.where(dv == 0, 0.0, jnp.sum(il) / jnp.where(dv == 0, 1.0, dv))

    reg = sum(grad_loss(2 ** s) for s in range(scales))
    return total + alpha * reg


if __name__ == "__main__":
    key = jax.random.PRNGKey(0)
    k1, k2, k3, k4, k5, k6 = jax.random.split(key, 6)

    fused_fn = jax.jit(midas_loss)

    # case 1: NCHW (B,1,H,W) f32 -> fused single-pass path
    pred1 = jax.random.normal(k1, (2, 1, 16, 16), dtype=jnp.float32)
    tgt1 = jax.random.normal(k2, (2, 1, 16, 16), dtype=jnp.float32)  # ~half > 0 -> mask
    out1 = jax.block_until_ready(fused_fn(pred1, tgt1))
    ref1 = jax.block_until_ready(_reference_midas_loss(pred1, tgt1))
    np.testing.assert_allclose(np.asarray(out1), np.asarray(ref1), rtol=1e-4, atol=1e-6)

    # case 2: 3-D f32 input, H not a multiple of 8 -> fused path with row padding
    pred2 = jax.random.normal(k3, (2, 20, 24), dtype=jnp.float32)
    tgt2 = jax.random.normal(k4, (2, 20, 24), dtype=jnp.float32)
    out2 = jax.block_until_ready(fused_fn(pred2, tgt2))
    ref2 = jax.block_until_ready(_reference_midas_loss(pred2, tgt2))
    np.testing.assert_allclose(np.asarray(out2), np.asarray(ref2), rtol=1e-4, atol=1e-6)

    # case 3: forced tiled fallback (small row tile) -> accumulator + gy-halo path
    tiled_fn = jax.jit(functools.partial(midas_loss, row_tile=8, force_tiled=True))
    out3 = jax.block_until_ready(tiled_fn(pred2, tgt2))
    np.testing.assert_allclose(np.asarray(out3), np.asarray(ref2), rtol=1e-4, atol=1e-6)

    # case 4: bf16 inputs streamed natively through the fused path (in-kernel f32 cast)
    pred4 = jax.random.normal(k5, (2, 32, 16), dtype=jnp.float32).astype(jnp.bfloat16)
    tgt4 = jax.random.normal(k6, (2, 32, 16), dtype=jnp.float32).astype(jnp.bfloat16)
    out4 = jax.block_until_ready(fused_fn(pred4, tgt4))
    ref4 = jax.block_until_ready(_reference_midas_loss(pred4, tgt4))
    np.testing.assert_allclose(np.asarray(out4), np.asarray(ref4), rtol=1e-4, atol=1e-6)

    # case 5: bf16 inputs through the tiled fallback (16-row tiles, two tiles, halo)
    tiled_bf16_fn = jax.jit(functools.partial(midas_loss, row_tile=16, force_tiled=True))
    out5 = jax.block_until_ready(tiled_bf16_fn(pred4, tgt4))
    np.testing.assert_allclose(np.asarray(out5), np.asarray(ref4), rtol=1e-4, atol=1e-6)

    print("KERNEL_OK")
</pallas_src>

<mosaic_0001>
module attributes {stable_mosaic.version = 11 : i64} {
  func.func @_fused_kernel(%arg0: i32, %arg1: memref<1x16x16xf32, #tpu.memory_space<vmem>>, %arg2: memref<1x16x16xf32, #tpu.memory_space<vmem>>, %arg3: memref<1x16x128xf32, #tpu.memory_space<vmem>>, %arg4: memref<16x16xf32, #tpu.memory_space<vmem>>, %arg5: memref<16x16xf32, #tpu.memory_space<vmem>>) attributes {dimension_semantics = [#tpu.dimension_semantics<parallel>], iteration_bounds = array<i64: 2>, scalar_prefetch = 0 : i64, scratch_operands = 2 : i64, tpu.core_type = #tpu.core_type<tc>, window_params = [{transform_indices = @transform_0, window_bounds = array<i64: 1, 16, 16>}, {transform_indices = @transform_1, window_bounds = array<i64: 1, 16, 16>}, {transform_indices = @transform_2, window_bounds = array<i64: 1, 16, 128>}]} {
    %c0 = arith.constant 0 : index
    %c0_0 = arith.constant 0 : index
    %c0_1 = arith.constant 0 : index
    %0 = vector.load %arg1[%c0, %c0_0, %c0_1] : memref<1x16x16xf32, #tpu.memory_space<vmem>>, vector<1x16x16xf32>
    %1 = vector.shape_cast %0 : vector<1x16x16xf32> to vector<16x16xf32>
    %c0_2 = arith.constant 0 : index
    %c0_3 = arith.constant 0 : index
    %c0_4 = arith.constant 0 : index
    %2 = vector.load %arg2[%c0_2, %c0_3, %c0_4] : memref<1x16x16xf32, #tpu.memory_space<vmem>>, vector<1x16x16xf32>
    %3 = vector.shape_cast %2 : vector<1x16x16xf32> to vector<16x16xf32>
    %cst = arith.constant 0.000000e+00 : f32
    %4 = vector.broadcast %cst : f32 to vector<16x16xf32>
    %5 = arith.cmpf ogt, %3, %4 : vector<16x16xf32>
    %6 = arith.extui %5 : vector<16x16xi1> to vector<16x16xi32>
    %7 = arith.sitofp %6 : vector<16x16xi32> to vector<16x16xf32>
    %8 = arith.mulf %7, %1 : vector<16x16xf32>
    %9 = arith.mulf %8, %1 : vector<16x16xf32>
    %10 = vector.shape_cast %9 : vector<16x16xf32> to vector<1x16x16xf32>
    %cst_5 = arith.constant dense<0.000000e+00> : vector<1xf32>
    %11 = vector.multi_reduction <add>, %10, %cst_5 [1, 2] : vector<1x16x16xf32> to vector<1xf32>
    %12 = vector.shape_cast %11 : vector<1xf32> to vector<1x1x1xf32>
    %13 = vector.extract %12[0, 0, 0] : f32 from vector<1x1x1xf32>
    %14 = vector.shape_cast %8 : vector<16x16xf32> to vector<1x16x16xf32>
    %cst_6 = arith.constant dense<0.000000e+00> : vector<1xf32>
    %15 = vector.multi_reduction <add>, %14, %cst_6 [1, 2] : vector<1x16x16xf32> to vector<1xf32>
    %16 = vector.shape_cast %15 : vector<1xf32> to vector<1x1x1xf32>
    %17 = vector.extract %16[0, 0, 0] : f32 from vector<1x1x1xf32>
    %18 = vector.shape_cast %7 : vector<16x16xf32> to vector<1x16x16xf32>
    %cst_7 = arith.constant dense<0.000000e+00> : vector<1xf32>
    %19 = vector.multi_reduction <add>, %18, %cst_7 [1, 2] : vector<1x16x16xf32> to vector<1xf32>
    %20 = vector.shape_cast %19 : vector<1xf32> to vector<1x1x1xf32>
    %21 = vector.extract %20[0, 0, 0] : f32 from vector<1x1x1xf32>
    %22 = arith.mulf %8, %3 : vector<16x16xf32>
    %23 = vector.shape_cast %22 : vector<16x16xf32> to vector<1x16x16xf32>
    %cst_8 = arith.constant dense<0.000000e+00> : vector<1xf32>
    %24 = vector.multi_reduction <add>, %23, %cst_8 [1, 2] : vector<1x16x16xf32> to vector<1xf32>
    %25 = vector.shape_cast %24 : vector<1xf32> to vector<1x1x1xf32>
    %26 = vector.extract %25[0, 0, 0] : f32 from vector<1x1x1xf32>
    %27 = arith.mulf %7, %3 : vector<16x16xf32>
    %28 = vector.shape_cast %27 : vector<16x16xf32> to vector<1x16x16xf32>
    %cst_9 = arith.constant dense<0.000000e+00> : vector<1xf32>
    %29 = vector.multi_reduction <add>, %28, %cst_9 [1, 2] : vector<1x16x16xf32> to vector<1xf32>
    %30 = vector.shape_cast %29 : vector<1xf32> to vector<1x1x1xf32>
    %31 = vector.extract %30[0, 0, 0] : f32 from vector<1x1x1xf32>
    %32 = arith.mulf %13, %21 : f32
    %33 = arith.mulf %17, %17 : f32
    %34 = arith.subf %32, %33 : f32
    %cst_10 = arith.constant 0.000000e+00 : f32
    %35 = arith.cmpf ogt, %34, %cst_10 : f32
    %cst_11 = arith.constant 1.000000e+00 : f32
    %36 = arith.select %35, %34, %cst_11 : f32
    %37 = arith.mulf %21, %26 : f32
    %38 = arith.mulf %17, %31 : f32
    %39 = arith.subf %37, %38 : f32
    %40 = arith.divf %39, %36 : f32
    %cst_12 = arith.constant 0.000000e+00 : f32
    %41 = arith.select %35, %40, %cst_12 : f32
    %42 = arith.mulf %13, %31 : f32
    %43 = arith.mulf %17, %26 : f32
    %44 = arith.subf %42, %43 : f32
    %45 = arith.divf %44, %36 : f32
    %cst_13 = arith.constant 0.000000e+00 : f32
    %46 = arith.select %35, %45, %cst_13 : f32
    %47 = vector.broadcast %41 : f32 to vector<16x16xf32>
    %48 = arith.mulf %47, %1 : vector<16x16xf32>
    %49 = vector.broadcast %46 : f32 to vector<16x16xf32>
    %50 = arith.addf %48, %49 : vector<16x16xf32>
    %51 = arith.subf %50, %3 : vector<16x16xf32>
    %52 = arith.mulf %7, %51 : vector<16x16xf32>
    %53 = arith.mulf %52, %51 : vector<16x16xf32>
    %54 = vector.shape_cast %53 : vector<16x16xf32> to vector<1x16x16xf32>
    %cst_14 = arith.constant dense<0.000000e+00> : vector<1xf32>
    %55 = vector.multi_reduction <add>, %54, %cst_14 [1, 2] : vector<1x16x16xf32> to vector<1xf32>
    %56 = vector.shape_cast %55 : vector<1xf32> to vector<1x1x1xf32>
    %57 = vector.extract %56[0, 0, 0] : f32 from vector<1x1x1xf32>
    %c0_15 = arith.constant 0 : index
    %c0_16 = arith.constant 0 : index
    %58 = vector.load %arg4[%c0_15, %c0_16] : memref<16x16xf32, #tpu.memory_space<vmem>>, vector<16x16xf32>
    tpu.vector_store %arg4[%c0_15, %c0_16], %52 {strides = array<i32>} : memref<16x16xf32, #tpu.memory_space<vmem>>, vector<16x16xf32>,
    %c0_17 = arith.constant 0 : index
    %c0_18 = arith.constant 0 : index
    %59 = vector.load %arg5[%c0_17, %c0_18] : memref<16x16xf32, #tpu.memory_space<vmem>>, vector<16x16xf32>
    tpu.vector_store %arg5[%c0_17, %c0_18], %7 {strides = array<i32>} : memref<16x16xf32, #tpu.memory_space<vmem>>, vector<16x16xf32>,
    %60 = tpu.iota {dimensions = array<i32: 1>} : vector<1x16xi32>
    %61 = vector.extract_strided_slice %52 {offsets = [0, 1], sizes = [16, 15], strides = [1, 1]} : vector<16x16xf32> to vector<16x15xf32>
    %62 = vector.extract_strided_slice %52 {offsets = [0, 0], sizes = [16, 15], strides = [1, 1]} : vector<16x16xf32> to vector<16x15xf32>
    %63 = arith.subf %61, %62 : vector<16x15xf32>
    %64 = math.absf %63 : vector<16x15xf32>
    %65 = vector.extract_strided_slice %7 {offsets = [0, 0], sizes = [16, 15], strides = [1, 1]} : vector<16x16xf32> to vector<16x15xf32>
    %66 = arith.mulf %64, %65 : vector<16x15xf32>
    %67 = vector.extract_strided_slice %7 {offsets = [0, 1], sizes = [16, 15], strides = [1, 1]} : vector<16x16xf32> to vector<16x15xf32>
    %68 = arith.mulf %66, %67 : vector<16x15xf32>
    %69 = vector.shape_cast %68 : vector<16x15xf32> to vector<1x16x15xf32>
    %cst_19 = arith.constant dense<0.000000e+00> : vector<1xf32>
    %70 = vector.multi_reduction <add>, %69, %cst_19 [1, 2] : vector<1x16x15xf32> to vector<1xf32>
    %71 = vector.shape_cast %70 : vector<1xf32> to vector<1x1x1xf32>
    %72 = vector.extract %71[0, 0, 0] : f32 from vector<1x1x1xf32>
    %cst_20 = arith.constant 0.000000e+00 : f32
    %73 = arith.addf %cst_20, %72 : f32
    %74 = vector.extract_strided_slice %52 {offsets = [1, 0], sizes = [15, 16], strides = [1, 1]} : vector<16x16xf32> to vector<15x16xf32>
    %75 = vector.extract_strided_slice %52 {offsets = [0, 0], sizes = [15, 16], strides = [1, 1]} : vector<16x16xf32> to vector<15x16xf32>
    %76 = arith.subf %74, %75 : vector<15x16xf32>
    %77 = math.absf %76 : vector<15x16xf32>
    %78 = vector.extract_strided_slice %7 {offsets = [0, 0], sizes = [15, 16], strides = [1, 1]} : vector<16x16xf32> to vector<15x16xf32>
    %79 = arith.mulf %77, %78 : vector<15x16xf32>
    %80 = vector.extract_strided_slice %7 {offsets = [1, 0], sizes = [15, 16], strides = [1, 1]} : vector<16x16xf32> to vector<15x16xf32>
    %81 = arith.mulf %79, %80 : vector<15x16xf32>
    %82 = vector.shape_cast %81 : vector<15x16xf32> to vector<1x15x16xf32>
    %cst_21 = arith.constant dense<0.000000e+00> : vector<1xf32>
    %83 = vector.multi_reduction <add>, %82, %cst_21 [1, 2] : vector<1x15x16xf32> to vector<1xf32>
    %84 = vector.shape_cast %83 : vector<1xf32> to vector<1x1x1xf32>
    %85 = vector.extract %84[0, 0, 0] : f32 from vector<1x1x1xf32>
    %86 = arith.addf %73, %85 : f32
    %c0_22 = arith.constant 0 : index
    %c0_23 = arith.constant 0 : index
    %87 = tpu.strided_load %arg4[%c0_22, %c0_23] {strides = array<i32: 2, 1>} : memref<16x16xf32, #tpu.memory_space<vmem>>, vector<8x16xf32>
    %c0_24 = arith.constant 0 : index
    %c0_25 = arith.constant 0 : index
    %88 = tpu.strided_load %arg5[%c0_24, %c0_25] {strides = array<i32: 2, 1>} : memref<16x16xf32, #tpu.memory_space<vmem>>, vector<8x16xf32>
    %c1_i32 = arith.constant 1 : i32
    %89 = vector.broadcast %c1_i32 : i32 to vector<1x16xi32>
    %90 = arith.andi %60, %89 : vector<1x16xi32>
    %c0_i32 = arith.constant 0 : i32
    %91 = vector.broadcast %c0_i32 : i32 to vector<1x16xi32>
    %92 = arith.cmpi eq, %90, %91 : vector<1x16xi32>
    %93 = arith.extui %92 : vector<1x16xi1> to vector<1x16xi32>
    %94 = arith.sitofp %93 : vector<1x16xi32> to vector<1x16xf32>
    %95 = vector.broadcast %94 : vector<1x16xf32> to vector<8x16xf32>
    %96 = arith.mulf %88, %95 : vector<8x16xf32>
    %97 = vector.shape_cast %96 : vector<8x16xf32> to vector<1x8x16xf32>
    %cst_26 = arith.constant dense<0.000000e+00> : vector<1xf32>
    %98 = vector.multi_reduction <add>, %97, %cst_26 [1, 2] : vector<1x8x16xf32> to vector<1xf32>
    %99 = vector.shape_cast %98 : vector<1xf32> to vector<1x1x1xf32>
    %100 = vector.extract %99[0, 0, 0] : f32 from vector<1x1x1xf32>
    %101 = vector.extract_strided_slice %87 {offsets = [0, 2], sizes = [8, 14], strides = [1, 1]} : vector<8x16xf32> to vector<8x14xf32>
    %102 = vector.extract_strided_slice %87 {offsets = [0, 0], sizes = [8, 14], strides = [1, 1]} : vector<8x16xf32> to vector<8x14xf32>
    %103 = arith.subf %101, %102 : vector<8x14xf32>
    %104 = math.absf %103 : vector<8x14xf32>
    %105 = vector.extract_strided_slice %88 {offsets = [0, 0], sizes = [8, 14], strides = [1, 1]} : vector<8x16xf32> to vector<8x14xf32>
    %106 = arith.mulf %104, %105 : vector<8x14xf32>
    %107 = vector.extract_strided_slice %88 {offsets = [0, 2], sizes = [8, 14], strides = [1, 1]} : vector<8x16xf32> to vector<8x14xf32>
    %108 = arith.mulf %106, %107 : vector<8x14xf32>
    %109 = vector.extract_strided_slice %94 {offsets = [0, 0], sizes = [1, 14], strides = [1, 1]} : vector<1x16xf32> to vector<1x14xf32>
    %110 = vector.broadcast %109 : vector<1x14xf32> to vector<8x14xf32>
    %111 = arith.mulf %108, %110 : vector<8x14xf32>
    %112 = vector.shape_cast %111 : vector<8x14xf32> to vector<1x8x14xf32>
    %cst_27 = arith.constant dense<0.000000e+00> : vector<1xf32>
    %113 = vector.multi_reduction <add>, %112, %cst_27 [1, 2] : vector<1x8x14xf32> to vector<1xf32>
    %114 = vector.shape_cast %113 : vector<1xf32> to vector<1x1x1xf32>
    %115 = vector.extract %114[0, 0, 0] : f32 from vector<1x1x1xf32>
    %cst_28 = arith.constant 0.000000e+00 : f32
    %116 = arith.addf %cst_28, %115 : f32
    %117 = vector.extract_strided_slice %87 {offsets = [1, 0], sizes = [7, 16], strides = [1, 1]} : vector<8x16xf32> to vector<7x16xf32>
    %118 = vector.extract_strided_slice %87 {offsets = [0, 0], sizes = [7, 16], strides = [1, 1]} : vector<8x16xf32> to vector<7x16xf32>
    %119 = arith.subf %117, %118 : vector<7x16xf32>
    %120 = math.absf %119 : vector<7x16xf32>
    %121 = vector.extract_strided_slice %88 {offsets = [0, 0], sizes = [7, 16], strides = [1, 1]} : vector<8x16xf32> to vector<7x16xf32>
    %122 = arith.mulf %120, %121 : vector<7x16xf32>
    %123 = vector.extract_strided_slice %88 {offsets = [1, 0], sizes = [7, 16], strides = [1, 1]} : vector<8x16xf32> to vector<7x16xf32>
    %124 = arith.mulf %122, %123 : vector<7x16xf32>
    %125 = vector.broadcast %94 : vector<1x16xf32> to vector<7x16xf32>
    %126 = arith.mulf %124, %125 : vector<7x16xf32>
    %127 = vector.shape_cast %126 : vector<7x16xf32> to vector<1x7x16xf32>
    %cst_29 = arith.constant dense<0.000000e+00> : vector<1xf32>
    %128 = vector.multi_reduction <add>, %127, %cst_29 [1, 2] : vector<1x7x16xf32> to vector<1xf32>
    %129 = vector.shape_cast %128 : vector<1xf32> to vector<1x1x1xf32>
    %130 = vector.extract %129[0, 0, 0] : f32 from vector<1x1x1xf32>
    %131 = arith.addf %116, %130 : f32
    %c0_30 = arith.constant 0 : index
    %c0_31 = arith.constant 0 : index
    %132 = tpu.strided_load %arg4[%c0_30, %c0_31] {strides = array<i32: 4, 1>} : memref<16x16xf32, #tpu.memory_space<vmem>>, vector<4x16xf32>
    %c0_32 = arith.constant 0 : index
    %c0_33 = arith.constant 0 : index
    %133 = tpu.strided_load %arg5[%c0_32, %c0_33] {strides = array<i32: 4, 1>} : memref<16x16xf32, #tpu.memory_space<vmem>>, vector<4x16xf32>
    %c3_i32 = arith.constant 3 : i32
    %134 = vector.broadcast %c3_i32 : i32 to vector<1x16xi32>
    %135 = arith.andi %60, %134 : vector<1x16xi32>
    %c0_i32_34 = arith.constant 0 : i32
    %136 = vector.broadcast %c0_i32_34 : i32 to vector<1x16xi32>
    %137 = arith.cmpi eq, %135, %136 : vector<1x16xi32>
    %138 = arith.extui %137 : vector<1x16xi1> to vector<1x16xi32>
    %139 = arith.sitofp %138 : vector<1x16xi32> to vector<1x16xf32>
    %140 = vector.broadcast %139 : vector<1x16xf32> to vector<4x16xf32>
    %141 = arith.mulf %133, %140 : vector<4x16xf32>
    %142 = vector.shape_cast %141 : vector<4x16xf32> to vector<1x4x16xf32>
    %cst_35 = arith.constant dense<0.000000e+00> : vector<1xf32>
    %143 = vector.multi_reduction <add>, %142, %cst_35 [1, 2] : vector<1x4x16xf32> to vector<1xf32>
    %144 = vector.shape_cast %143 : vector<1xf32> to vector<1x1x1xf32>
    %145 = vector.extract %144[0, 0, 0] : f32 from vector<1x1x1xf32>
    %146 = vector.extract_strided_slice %132 {offsets = [0, 4], sizes = [4, 12], strides = [1, 1]} : vector<4x16xf32> to vector<4x12xf32>
    %147 = vector.extract_strided_slice %132 {offsets = [0, 0], sizes = [4, 12], strides = [1, 1]} : vector<4x16xf32> to vector<4x12xf32>
    %148 = arith.subf %146, %147 : vector<4x12xf32>
    %149 = math.absf %148 : vector<4x12xf32>
    %150 = vector.extract_strided_slice %133 {offsets = [0, 0], sizes = [4, 12], strides = [1, 1]} : vector<4x16xf32> to vector<4x12xf32>
    %151 = arith.mulf %149, %150 : vector<4x12xf32>
    %152 = vector.extract_strided_slice %133 {offsets = [0, 4], sizes = [4, 12], strides = [1, 1]} : vector<4x16xf32> to vector<4x12xf32>
    %153 = arith.mulf %151, %152 : vector<4x12xf32>
    %154 = vector.extract_strided_slice %139 {offsets = [0, 0], sizes = [1, 12], strides = [1, 1]} : vector<1x16xf32> to vector<1x12xf32>
    %155 = vector.broadcast %154 : vector<1x12xf32> to vector<4x12xf32>
    %156 = arith.mulf %153, %155 : vector<4x12xf32>
    %157 = vector.shape_cast %156 : vector<4x12xf32> to vector<1x4x12xf32>
    %cst_36 = arith.constant dense<0.000000e+00> : vector<1xf32>
    %158 = vector.multi_reduction <add>, %157, %cst_36 [1, 2] : vector<1x4x12xf32> to vector<1xf32>
    %159 = vector.shape_cast %158 : vector<1xf32> to vector<1x1x1xf32>
    %160 = vector.extract %159[0, 0, 0] : f32 from vector<1x1x1xf32>
    %cst_37 = arith.constant 0.000000e+00 : f32
    %161 = arith.addf %cst_37, %160 : f32
    %162 = vector.extract_strided_slice %132 {offsets = [1, 0], sizes = [3, 16], strides = [1, 1]} : vector<4x16xf32> to vector<3x16xf32>
    %163 = vector.extract_strided_slice %132 {offsets = [0, 0], sizes = [3, 16], strides = [1, 1]} : vector<4x16xf32> to vector<3x16xf32>
    %164 = arith.subf %162, %163 : vector<3x16xf32>
    %165 = math.absf %164 : vector<3x16xf32>
    %166 = vector.extract_strided_slice %133 {offsets = [0, 0], sizes = [3, 16], strides = [1, 1]} : vector<4x16xf32> to vector<3x16xf32>
    %167 = arith.mulf %165, %166 : vector<3x16xf32>
    %168 = vector.extract_strided_slice %133 {offsets = [1, 0], sizes = [3, 16], strides = [1, 1]} : vector<4x16xf32> to vector<3x16xf32>
    %169 = arith.mulf %167, %168 : vector<3x16xf32>
    %170 = vector.broadcast %139 : vector<1x16xf32> to vector<3x16xf32>
    %171 = arith.mulf %169, %170 : vector<3x16xf32>
    %172 = vector.shape_cast %171 : vector<3x16xf32> to vector<1x3x16xf32>
    %cst_38 = arith.constant dense<0.000000e+00> : vector<1xf32>
    %173 = vector.multi_reduction <add>, %172, %cst_38 [1, 2] : vector<1x3x16xf32> to vector<1xf32>
    %174 = vector.shape_cast %173 : vector<1xf32> to vector<1x1x1xf32>
    %175 = vector.extract %174[0, 0, 0] : f32 from vector<1x1x1xf32>
    %176 = arith.addf %161, %175 : f32
    %c0_39 = arith.constant 0 : index
    %c0_40 = arith.constant 0 : index
    %177 = tpu.strided_load %arg4[%c0_39, %c0_40] {strides = array<i32: 8, 1>} : memref<16x16xf32, #tpu.memory_space<vmem>>, vector<2x16xf32>
    %c0_41 = arith.constant 0 : index
    %c0_42 = arith.constant 0 : index
    %178 = tpu.strided_load %arg5[%c0_41, %c0_42] {strides = array<i32: 8, 1>} : memref<16x16xf32, #tpu.memory_space<vmem>>, vector<2x16xf32>
    %c7_i32 = arith.constant 7 : i32
    %179 = vector.broadcast %c7_i32 : i32 to vector<1x16xi32>
    %180 = arith.andi %60, %179 : vector<1x16xi32>
    %c0_i32_43 = arith.constant 0 : i32
    %181 = vector.broadcast %c0_i32_43 : i32 to vector<1x16xi32>
    %182 = arith.cmpi eq, %180, %181 : vector<1x16xi32>
    %183 = arith.extui %182 : vector<1x16xi1> to vector<1x16xi32>
    %184 = arith.sitofp %183 : vector<1x16xi32> to vector<1x16xf32>
    %185 = vector.broadcast %184 : vector<1x16xf32> to vector<2x16xf32>
    %186 = arith.mulf %178, %185 : vector<2x16xf32>
    %187 = vector.shape_cast %186 : vector<2x16xf32> to vector<1x2x16xf32>
    %cst_44 = arith.constant dense<0.000000e+00> : vector<1xf32>
    %188 = vector.multi_reduction <add>, %187, %cst_44 [1, 2] : vector<1x2x16xf32> to vector<1xf32>
    %189 = vector.shape_cast %188 : vector<1xf32> to vector<1x1x1xf32>
    %190 = vector.extract %189[0, 0, 0] : f32 from vector<1x1x1xf32>
    %191 = vector.extract_strided_slice %177 {offsets = [0, 8], sizes = [2, 8], strides = [1, 1]} : vector<2x16xf32> to vector<2x8xf32>
    %192 = vector.extract_strided_slice %177 {offsets = [0, 0], sizes = [2, 8], strides = [1, 1]} : vector<2x16xf32> to vector<2x8xf32>
    %193 = arith.subf %191, %192 : vector<2x8xf32>
    %194 = math.absf %193 : vector<2x8xf32>
    %195 = vector.extract_strided_slice %178 {offsets = [0, 0], sizes = [2, 8], strides = [1, 1]} : vector<2x16xf32> to vector<2x8xf32>
    %196 = arith.mulf %194, %195 : vector<2x8xf32>
    %197 = vector.extract_strided_slice %178 {offsets = [0, 8], sizes = [2, 8], strides = [1, 1]} : vector<2x16xf32> to vector<2x8xf32>
    %198 = arith.mulf %196, %197 : vector<2x8xf32>
    %199 = vector.extract_strided_slice %184 {offsets = [0, 0], sizes = [1, 8], strides = [1, 1]} : vector<1x16xf32> to vector<1x8xf32>
    %200 = vector.broadcast %199 : vector<1x8xf32> to vector<2x8xf32>
    %201 = arith.mulf %198, %200 : vector<2x8xf32>
    %202 = vector.shape_cast %201 : vector<2x8xf32> to vector<1x2x8xf32>
    %cst_45 = arith.constant dense<0.000000e+00> : vector<1xf32>
    %203 = vector.multi_reduction <add>, %202, %cst_45 [1, 2] : vector<1x2x8xf32> to vector<1xf32>
    %204 = vector.shape_cast %203 : vector<1xf32> to vector<1x1x1xf32>
    %205 = vector.extract %204[0, 0, 0] : f32 from vector<1x1x1xf32>
    %cst_46 = arith.constant 0.000000e+00 : f32
    %206 = arith.addf %cst_46, %205 : f32
    %207 = vector.extract_strided_slice %177 {offsets = [1, 0], sizes = [1, 16], strides = [1, 1]} : vector<2x16xf32> to vector<1x16xf32>
    %208 = vector.extract_strided_slice %177 {offsets = [0, 0], sizes = [1, 16], strides = [1, 1]} : vector<2x16xf32> to vector<1x16xf32>
    %209 = arith.subf %207, %208 : vector<1x16xf32>
    %210 = math.absf %209 : vector<1x16xf32>
    %211 = vector.extract_strided_slice %178 {offsets = [0, 0], sizes = [1, 16], strides = [1, 1]} : vector<2x16xf32> to vector<1x16xf32>
    %212 = arith.mulf %210, %211 : vector<1x16xf32>
    %213 = vector.extract_strided_slice %178 {offsets = [1, 0], sizes = [1, 16], strides = [1, 1]} : vector<2x16xf32> to vector<1x16xf32>
    %214 = arith.mulf %212, %213 : vector<1x16xf32>
    %215 = arith.mulf %214, %184 : vector<1x16xf32>
    %216 = vector.shape_cast %215 : vector<1x16xf32> to vector<1x1x16xf32>
    %cst_47 = arith.constant dense<0.000000e+00> : vector<1xf32>
    %217 = vector.multi_reduction <add>, %216, %cst_47 [1, 2] : vector<1x1x16xf32> to vector<1xf32>
    %218 = vector.shape_cast %217 : vector<1xf32> to vector<1x1x1xf32>
    %219 = vector.extract %218[0, 0, 0] : f32 from vector<1x1x1xf32>
    %220 = arith.addf %206, %219 : f32
    %221 = tpu.iota {dimensions = array<i32: 1>} : vector<1x16x128xi32>
    %c0_i32_48 = arith.constant 0 : i32
    %222 = vector.broadcast %c0_i32_48 : i32 to vector<1x16x128xi32>
    %223 = arith.cmpi eq, %221, %222 : vector<1x16x128xi32>
    %cst_49 = arith.constant 0.000000e+00 : f32
    %224 = vector.broadcast %57 : f32 to vector<1x16x128xf32>
    %225 = vector.broadcast %cst_49 : f32 to vector<1x16x128xf32>
    %226 = arith.select %223, %224, %225 : vector<1x16x128xi1>, vector<1x16x128xf32>
    %c9_i32 = arith.constant 9 : i32
    %227 = vector.broadcast %c9_i32 : i32 to vector<1x16x128xi32>
    %228 = arith.cmpi eq, %221, %227 : vector<1x16x128xi32>
    %cst_50 = arith.constant 0.000000e+00 : f32
    %229 = vector.broadcast %21 : f32 to vector<1x16x128xf32>
    %230 = vector.broadcast %cst_50 : f32 to vector<1x16x128xf32>
    %231 = arith.select %228, %229, %230 : vector<1x16x128xi1>, vector<1x16x128xf32>
    %232 = arith.addf %226, %231 : vector<1x16x128xf32>
    %c1_i32_51 = arith.constant 1 : i32
    %233 = vector.broadcast %c1_i32_51 : i32 to vector<1x16x128xi32>
    %234 = arith.cmpi eq, %221, %233 : vector<1x16x128xi32>
    %cst_52 = arith.constant 0.000000e+00 : f32
    %235 = vector.broadcast %86 : f32 to vector<1x16x128xf32>
    %236 = vector.broadcast %cst_52 : f32 to vector<1x16x128xf32>
    %237 = arith.select %234, %235, %236 : vector<1x16x128xi1>, vector<1x16x128xf32>
    %238 = arith.addf %232, %237 : vector<1x16x128xf32>
    %c5_i32 = arith.constant 5 : i32
    %239 = vector.broadcast %c5_i32 : i32 to vector<1x16x128xi32>
    %240 = arith.cmpi eq, %221, %239 : vector<1x16x128xi32>
    %cst_53 = arith.constant 0.000000e+00 : f32
    %241 = vector.broadcast %21 : f32 to vector<1x16x128xf32>
    %242 = vector.broadcast %cst_53 : f32 to vector<1x16x128xf32>
    %243 = arith.select %240, %241, %242 : vector<1x16x128xi1>, vector<1x16x128xf32>
    %244 = arith.addf %238, %243 : vector<1x16x128xf32>
    %c2_i32 = arith.constant 2 : i32
    %245 = vector.broadcast %c2_i32 : i32 to vector<1x16x128xi32>
    %246 = arith.cmpi eq, %221, %245 : vector<1x16x128xi32>
    %cst_54 = arith.constant 0.000000e+00 : f32
    %247 = vector.broadcast %131 : f32 to vector<1x16x128xf32>
    %248 = vector.broadcast %cst_54 : f32 to vector<1x16x128xf32>
    %249 = arith.select %246, %247, %248 : vector<1x16x128xi1>, vector<1x16x128xf32>
    %250 = arith.addf %244, %249 : vector<1x16x128xf32>
    %c6_i32 = arith.constant 6 : i32
    %251 = vector.broadcast %c6_i32 : i32 to vector<1x16x128xi32>
    %252 = arith.cmpi eq, %221, %251 : vector<1x16x128xi32>
    %cst_55 = arith.constant 0.000000e+00 : f32
    %253 = vector.broadcast %100 : f32 to vector<1x16x128xf32>
    %254 = vector.broadcast %cst_55 : f32 to vector<1x16x128xf32>
    %255 = arith.select %252, %253, %254 : vector<1x16x128xi1>, vector<1x16x128xf32>
    %256 = arith.addf %250, %255 : vector<1x16x128xf32>
    %c3_i32_56 = arith.constant 3 : i32
    %257 = vector.broadcast %c3_i32_56 : i32 to vector<1x16x128xi32>
    %258 = arith.cmpi eq, %221, %257 : vector<1x16x128xi32>
    %cst_57 = arith.constant 0.000000e+00 : f32
    %259 = vector.broadcast %176 : f32 to vector<1x16x128xf32>
    %260 = vector.broadcast %cst_57 : f32 to vector<1x16x128xf32>
    %261 = arith.select %258, %259, %260 : vector<1x16x128xi1>, vector<1x16x128xf32>
    %262 = arith.addf %256, %261 : vector<1x16x128xf32>
    %c7_i32_58 = arith.constant 7 : i32
    %263 = vector.broadcast %c7_i32_58 : i32 to vector<1x16x128xi32>
    %264 = arith.cmpi eq, %221, %263 : vector<1x16x128xi32>
    %cst_59 = arith.constant 0.000000e+00 : f32
    %265 = vector.broadcast %145 : f32 to vector<1x16x128xf32>
    %266 = vector.broadcast %cst_59 : f32 to vector<1x16x128xf32>
    %267 = arith.select %264, %265, %266 : vector<1x16x128xi1>, vector<1x16x128xf32>
    %268 = arith.addf %262, %267 : vector<1x16x128xf32>
    %c4_i32 = arith.constant 4 : i32
    %269 = vector.broadcast %c4_i32 : i32 to vector<1x16x128xi32>
    %270 = arith.cmpi eq, %221, %269 : vector<1x16x128xi32>
    %cst_60 = arith.constant 0.000000e+00 : f32
    %271 = vector.broadcast %220 : f32 to vector<1x16x128xf32>
    %272 = vector.broadcast %cst_60 : f32 to vector<1x16x128xf32>
    %273 = arith.select %270, %271, %272 : vector<1x16x128xi1>, vector<1x16x128xf32>
    %274 = arith.addf %268, %273 : vector<1x16x128xf32>
    %c8_i32 = arith.constant 8 : i32
    %275 = vector.broadcast %c8_i32 : i32 to vector<1x16x128xi32>
    %276 = arith.cmpi eq, %221, %275 : vector<1x16x128xi32>
    %cst_61 = arith.constant 0.000000e+00 : f32
    %277 = vector.broadcast %190 : f32 to vector<1x16x128xf32>
    %278 = vector.broadcast %cst_61 : f32 to vector<1x16x128xf32>
    %279 = arith.select %276, %277, %278 : vector<1x16x128xi1>, vector<1x16x128xf32>
    %280 = arith.addf %274, %279 : vector<1x16x128xf32>
    %c0_62 = arith.constant 0 : index
    %c0_63 = arith.constant 0 : index
    %c0_64 = arith.constant 0 : index
    %281 = vector.load %arg3[%c0_62, %c0_63, %c0_64] : memref<1x16x128xf32, #tpu.memory_space<vmem>>, vector<1x16x128xf32>
    tpu.vector_store %arg3[%c0_62, %c0_63, %c0_64], %280 {strides = array<i32>} : memref<1x16x128xf32, #tpu.memory_space<vmem>>, vector<1x16x128xf32>,
    return
  }
  func.func @transform_0(%arg0: i32) -> (i32, i32, i32) {
    %c0_i32 = arith.constant 0 : i32
    %c0_i32_0 = arith.constant 0 : i32
    %c0_i32_1 = arith.constant 0 : i32
    return %arg0, %c0_i32, %c0_i32_0 : i32, i32, i32
  }
  func.func @transform_1(%arg0: i32) -> (i32, i32, i32) {
    %c0_i32 = arith.constant 0 : i32
    %c0_i32_0 = arith.constant 0 : i32
    %c0_i32_1 = arith.constant 0 : i32
    return %arg0, %c0_i32, %c0_i32_0 : i32, i32, i32
  }
  func.func @transform_2(%arg0: i32) -> (i32, i32, i32) {
    %c0_i32 = arith.constant 0 : i32
    %c0_i32_0 = arith.constant 0 : i32
    %c0_i32_1 = arith.constant 0 : i32
    return %arg0, %c0_i32, %c0_i32_0 : i32, i32, i32
  }
}

</mosaic_0001>

<llo_original>
// kernel: midas_loss.1
$region0: #{midas_loss.1}
  #allocation0 [shape = 'u32[]', space=smem, size = 0x4, offset = 0x4, fixed_abs, tag = 'smem constant byte address 0x4 - core index']
  #allocation1 [shape = 'u32[144,128]{1,0:T(1,128)}', space=vmem, size = 0x12000, scoped, tag = 'internal scratch']
  #allocation2 [shape = 'f32[16,16]{1,0:T(8,128)}', space=vmem, size = 0x2000, scoped, tag = 'scratch operand']
  #allocation3 [shape = 'f32[16,16]{1,0:T(8,128)}', space=vmem, size = 0x2000, scoped, tag = 'scratch operand']
  %s0 = inlined_call_operand.hbm [shape: f32[2,16,16], index: 0, kind: input, shape index: {}]
  %s1 = inlined_call_operand.hbm [shape: f32[2,16,16], index: 1, kind: input, shape index: {}]
  %s2 = inlined_call_operand.vmem [shape: f32[2,16,128], index: 2, kind: output, shape index: {}]
  %s3 = sld [smem:[#allocation0]]
  $region49: #{midas_loss.1} parent=0
    _
  %s5 = ssub.s32 1, %s3
  %s6 = scalar_select 0, %s5, %s3
  $region1: #{midas_loss.1} parent=0
    #allocation4 [shape = 'u8[16384]{0}', space=vmem, size = 0x4000, scoped, tag = 'input window, operand 0']
    #allocation5 [shape = 's32[2]{0}', space=sflag, size = 0x8, scoped, tag = 'scoped memory for midas_loss.1']
    #allocation6 [shape = 'u8[16384]{0}', space=vmem, size = 0x4000, scoped, tag = 'input window, operand 1']
    #allocation7 [shape = 's32[2]{0}', space=sflag, size = 0x8, scoped, tag = 'scoped memory for midas_loss.1']
    %7 = vsyncpa [#allocation5], 0
    %s8 = scalar_lea.sflag [#allocation5], 1
    %9 = vsyncpa %s8, 0
    %10 = vsyncpa [#allocation7], 0
    %s11 = scalar_lea.sflag [#allocation7], 1
    %12 = vsyncpa %s11, 0
    loop: start=0, step=1, limit=4
    $region2: #{midas_loss.1} parent=1 // loop_pre_header
      _
    $region3: #{midas_loss.1} parent=1 // loop_header
      %s14 = sphi 0, %s18
      %p15 = scmp.ge.s32.totalorder %s14, 4
      %s24 = sphi 0, %s26
      %s27 = sphi 0, %s24
      %s28 = sphi 0, %s27
      %s44 = sphi 0, %s28
      %s50 = sphi 0, %s52
      %s53 = sphi 0, %s50
      %s54 = sphi 0, %s53
      %s70 = sphi 0, %s54
      %s76 = sphi 0, %s78
      %s79 = sphi 0, %s76
      %s80 = sphi 0, %s79
      %s96 = sphi 0, %s80
    $region4: #{midas_loss.1} parent=1 // loop_header_branch
      %17 = sbr.rel (%p15) target = $region8
    $region5: #{midas_loss.1} parent=1 // loop_body
      %s19 = ssub.s32 %s14, 1
      %s20 = ssub.s32 %s14, 2
      %s21 = sadd.s32 %s14, 1
      %s22 = ssub.s32 %s14, %s21
      %p23 = scmp.eq.s32.totalorder %s22, 0
      %s25 = sadd.s32 %s24, 1
      %s26 = scalar_select %p23, %s24, %s25
      %p29 = pneg %p23
      %p30 = scmp.eq.s32.totalorder %s14, 1
      %p31 = por %p29, %p30
      %p32 = scmp.ne.s32.totalorder %s24, %s27
      %p33 = scmp.eq.s32.totalorder %s14, 0
      %p34 = por %p32, %p33
      %p35 = scmp.ne.s32.totalorder %s24, %s27
      %p36 = scmp.eq.s32.totalorder %s19, 1
      %p37 = por %p35, %p36
      %p38 = scmp.ne.s32.totalorder %s27, %s28
      %p39 = scmp.eq.s32.totalorder %s19, 0
      %p40 = por %p38, %p39
      %p41 = scmp.ne.s32.totalorder %s27, %s28
      %p42 = scmp.eq.s32.totalorder %s20, 1
      %p43 = por %p41, %p42
      %p45 = scmp.ne.s32.totalorder %s28, %s44
      %p46 = scmp.eq.s32.totalorder %s20, 0
      %p47 = por %p45, %p46
      %s48 = ssub.s32 %s14, %s21
      %p49 = scmp.eq.s32.totalorder %s48, 0
      %s51 = sadd.s32 %s50, 1
      %s52 = scalar_select %p49, %s50, %s51
      %p55 = pneg %p49
      %p56 = scmp.eq.s32.totalorder %s14, 1
      %p57 = por %p55, %p56
      %p58 = scmp.ne.s32.totalorder %s50, %s53
      %p59 = scmp.eq.s32.totalorder %s14, 0
      %p60 = por %p58, %p59
      %p61 = scmp.ne.s32.totalorder %s50, %s53
      %p62 = scmp.eq.s32.totalorder %s19, 1
      %p63 = por %p61, %p62
      %p64 = scmp.ne.s32.totalorder %s53, %s54
      %p65 = scmp.eq.s32.totalorder %s19, 0
      %p66 = por %p64, %p65
      %p67 = scmp.ne.s32.totalorder %s53, %s54
      %p68 = scmp.eq.s32.totalorder %s20, 1
      %p69 = por %p67, %p68
      %p71 = scmp.ne.s32.totalorder %s54, %s70
      %p72 = scmp.eq.s32.totalorder %s20, 0
      %p73 = por %p71, %p72
      %s74 = ssub.s32 %s14, %s21
      %p75 = scmp.eq.s32.totalorder %s74, 0
      %s77 = sadd.s32 %s76, 1
      %s78 = scalar_select %p75, %s76, %s77
      %p81 = pneg %p75
      %p82 = scmp.eq.s32.totalorder %s14, 1
      %p83 = por %p81, %p82
      %p84 = scmp.ne.s32.totalorder %s76, %s79
      %p85 = scmp.eq.s32.totalorder %s14, 0
      %p86 = por %p84, %p85
      %p87 = scmp.ne.s32.totalorder %s76, %s79
      %p88 = scmp.eq.s32.totalorder %s19, 1
      %p89 = por %p87, %p88
      %p90 = scmp.ne.s32.totalorder %s79, %s80
      %p91 = scmp.eq.s32.totalorder %s19, 0
      %p92 = por %p90, %p91
      %p93 = scmp.ne.s32.totalorder %s79, %s80
      %p94 = scmp.eq.s32.totalorder %s20, 1
      %p95 = por %p93, %p94
      %p97 = scmp.ne.s32.totalorder %s80, %s96
      %p98 = scmp.eq.s32.totalorder %s20, 0
      %p99 = por %p97, %p98
      %p100 = scmp.le.s32.totalorder 1, %s14
      %p101 = scmp.lt.s32.totalorder %s14, 3
      %p102 = pnand %p100, %p101
      %p103 = pneg %p102
      // Predicated region
      $region9: #{midas_loss.1} parent=5 // pred_check
        _
      $region10: #{midas_loss.1} parent=5 // pred_check_branch
        %105 = sbr.rel (%p102) target = $region12
      $region11: #{midas_loss.1} parent=5 // pred_region
        %s106 = ssub.s32 %s14, 1
      $region12: #{midas_loss.1} parent=5 // pred_fallthru
        _
      %p107 = scmp.lt.s32.totalorder %s14, 2
      // Predicated region
      $region13: #{midas_loss.1} parent=5 // pred_check
        %p108 = pneg %p107
      $region14: #{midas_loss.1} parent=5 // pred_check_branch
        %110 = sbr.rel (%p108) target = $region16
      $region15: #{midas_loss.1} parent=5 // pred_region
        // Predicated region
        $region17: #{midas_loss.1} parent=15 // pred_check
          %p111 = pneg %p34
        $region18: #{midas_loss.1} parent=15 // pred_check_branch
          %113 = sbr.rel (%p111) target = $region20
        $region19: #{midas_loss.1} parent=15 // pred_region
          %s114 = sand.u32 %s24, 1
          %s115 = scalar_lea.sflag [#allocation5], %s114
          %s116 = sand.u32 %s24, 1
          %s117 = smul.addr %s116, 16
          %s118 = scalar_lea.vmem [#allocation4], %s117
          %s120 = ssub.s32 256, 256
          %121 = vsyncadd %s115, %s120
          %s122 = smul.addr %s14, 2
          %s123 = smul.addr %s122, 128
          %s124 = scalar_lea.hbm %s0, %s123
          %s125 = sshll.u32 %s118, 4
          %s126 = int_to_ptr.vmem [resolvable:$true] %s125
          %131 = dma.hbm_to_vmem [thread:$0]  %s124, 256, %s126, %s115, 128, 128, 8
        $region20: #{midas_loss.1} parent=15 // pred_fallthru
          _
        // Predicated region
        $region21: #{midas_loss.1} parent=15 // pred_check
          %p132 = pneg %p60
        $region22: #{midas_loss.1} parent=15 // pred_check_branch
          %134 = sbr.rel (%p132) target = $region24
        $region23: #{midas_loss.1} parent=15 // pred_region
          %s135 = sand.u32 %s50, 1
          %s136 = scalar_lea.sflag [#allocation7], %s135
          %s137 = sand.u32 %s50, 1
          %s138 = smul.addr %s137, 16
          %s139 = scalar_lea.vmem [#allocation6], %s138
          %s141 = ssub.s32 256, 256
          %142 = vsyncadd %s136, %s141
          %s143 = smul.addr %s14, 2
          %s144 = smul.addr %s143, 128
          %s145 = scalar_lea.hbm %s1, %s144
          %s146 = sshll.u32 %s139, 4
          %s147 = int_to_ptr.vmem [resolvable:$true] %s146
          %152 = dma.hbm_to_vmem [thread:$0]  %s145, 256, %s147, %s136, 128, 128, 8
        $region24: #{midas_loss.1} parent=15 // pred_fallthru
          _
      $region16: #{midas_loss.1} parent=5 // pred_fallthru
        _
      %p153 = scmp.le.s32.totalorder 1, %s14
      %p154 = scmp.lt.s32.totalorder %s14, 3
      %p155 = pnand %p153, %p154
      %p156 = pneg %p155
      // Predicated region
      $region25: #{midas_loss.1} parent=5 // pred_check
        _
      $region26: #{midas_loss.1} parent=5 // pred_check_branch
        %158 = sbr.rel (%p155) target = $region28
      $region27: #{midas_loss.1} parent=5 // pred_region
        %s159 = ssub.s32 %s14, 1
        %s160 = sand.u32 %s27, 1
        %s161 = scalar_lea.sflag [#allocation5], %s160
        %s162 = sand.u32 %s27, 1
        %s163 = smul.addr %s162, 16
        %s164 = scalar_lea.vmem [#allocation4], %s163
        // Predicated region
        $region29: #{midas_loss.1} parent=27 // pred_check
          %p165 = pneg %p40
        $region30: #{midas_loss.1} parent=27 // pred_check_branch
          %167 = sbr.rel (%p165) target = $region32
        $region31: #{midas_loss.1} parent=27 // pred_region
          %168 = dma.done %s161, 256
        $region32: #{midas_loss.1} parent=27 // pred_fallthru
          _
        %s169 = sand.u32 %s53, 1
        %s170 = scalar_lea.sflag [#allocation7], %s169
        %s171 = sand.u32 %s53, 1
        %s172 = smul.addr %s171, 16
        %s173 = scalar_lea.vmem [#allocation6], %s172
        // Predicated region
        $region33: #{midas_loss.1} parent=27 // pred_check
          %p174 = pneg %p66
        $region34: #{midas_loss.1} parent=27 // pred_check_branch
          %176 = sbr.rel (%p174) target = $region36
        $region35: #{midas_loss.1} parent=27 // pred_region
          %177 = dma.done %s170, 256
        $region36: #{midas_loss.1} parent=27 // pred_fallthru
          _
        %s178 = sand.u32 %s27, 1
        %s179 = scalar_lea.sflag [#allocation5], %s178
        %s180 = sand.u32 %s27, 1
        %s181 = smul.addr %s180, 16
        %s182 = scalar_lea.vmem [#allocation4], %s181
        %p183 = pneg %p40
        %p184 = pneg %p37
        %s185 = sand.u32 %s53, 1
        %s186 = scalar_lea.sflag [#allocation7], %s185
        %s187 = sand.u32 %s53, 1
        %s188 = smul.addr %s187, 16
        %s189 = scalar_lea.vmem [#allocation6], %s188
        %p190 = pneg %p66
        %p191 = pneg %p63
        %p192 = pneg %p92
        %p193 = pneg %p89
        %p194 = scmp.lt.s32.totalorder %s19, 1
        %s195 = scalar_select %p194, %s19, 1
        %s196 = smul.addr %s195, 2
        %s197 = smul.addr %s196, 8
        %s198 = scalar_lea.vmem %s2, %s197
        %p199 = scmp.lt.s32.totalorder %s19, 1
        %s200 = scalar_select %p199, %s19, 1
        %s201 = smul.addr %s200, 2
        %s202 = smul.addr %s201, 8
        %s203 = scalar_lea.vmem %s2, %s202
        %v204 = vld [vmem:[%s164] sm:$0xff]
        %v205 = vld [vmem:[%s164 + $0x8] sm:$0xff]
        %v206 = vld [vmem:[%s173] sm:$0xff]
        %v207 = vld [vmem:[%s173 + $0x8] sm:$0xff]
        %vm208 = vcmp.gt.f32.partialorder %v206, 0.0
        %vm209 = vcmp.gt.f32.partialorder %v207, 0.0
        %v210 = vsel %vm208, 1, 0
        %v211 = vsel %vm209, 1, 0
        %v212 = vcvt.s32.f32 %v210
        %v213 = vcvt.s32.f32 %v211
        %v214 = vmul.f32 %v212, %v204
        %v215 = vmul.f32 %v213, %v205
        %v216 = vmul.f32 %v214, %v204
        %v217 = vmul.f32 %v215, %v205
        %vm218 = vcmask 130048
        %v219 = vsel %vm218, %v216, 0.0
        %v220 = vsel %vm218, %v217, 0.0
        %v221 = vadd.f32 %v219, %v220
        %222 = vadd.xlane.f32.xlu0 %v221
        %v223 = vpop.xlane.xlu0 %222
        %v224 = vrot.slane %v223, 4
        %v225 = vadd.f32 %v223, %v224
        %v226 = vrot.slane %v225, 2
        %v227 = vadd.f32 %v225, %v226
        %v228 = vrot.slane %v227, 1
        %v229 = vadd.f32 %v227, %v228
        %s230 = vtos %v229
        %v231 = vsel %vm218, %v214, 0.0
        %v232 = vsel %vm218, %v215, 0.0
        %v233 = vadd.f32 %v231, %v232
        %234 = vadd.xlane.f32.xlu0 %v233
        %v235 = vpop.xlane.xlu0 %234
        %v236 = vrot.slane %v235, 4
        %v237 = vadd.f32 %v235, %v236
        %v238 = vrot.slane %v237, 2
        %v239 = vadd.f32 %v237, %v238
        %v240 = vrot.slane %v239, 1
        %v241 = vadd.f32 %v239, %v240
        %s242 = vtos %v241
        %v243 = vsel %vm218, %v212, 0.0
        %v244 = vsel %vm218, %v213, 0.0
        %v245 = vadd.f32 %v243, %v244
        %246 = vadd.xlane.f32.xlu0 %v245
        %v247 = vpop.xlane.xlu0 %246
        %v248 = vrot.slane %v247, 4
        %v249 = vadd.f32 %v247, %v248
        %v250 = vrot.slane %v249, 2
        %v251 = vadd.f32 %v249, %v250
        %v252 = vrot.slane %v251, 1
        %v253 = vadd.f32 %v251, %v252
        %s254 = vtos %v253
        %v255 = vmul.f32 %v214, %v206
        %v256 = vmul.f32 %v215, %v207
        %v257 = vsel %vm218, %v255, 0.0
        %v258 = vsel %vm218, %v256, 0.0
        %v259 = vadd.f32 %v257, %v258
        %260 = vadd.xlane.f32.xlu0 %v259
        %v261 = vpop.xlane.xlu0 %260
        %v262 = vrot.slane %v261, 4
        %v263 = vadd.f32 %v261, %v262
        %v264 = vrot.slane %v263, 2
        %v265 = vadd.f32 %v263, %v264
        %v266 = vrot.slane %v265, 1
        %v267 = vadd.f32 %v265, %v266
        %s268 = vtos %v267
        %v269 = vmul.f32 %v212, %v206
        %v270 = vmul.f32 %v213, %v207
        %v271 = vsel %vm218, %v269, 0.0
        %v272 = vsel %vm218, %v270, 0.0
        %v273 = vadd.f32 %v271, %v272
        %274 = vadd.xlane.f32.xlu0 %v273
        %v275 = vpop.xlane.xlu0 %274
        %v276 = vrot.slane %v275, 4
        %v277 = vadd.f32 %v275, %v276
        %v278 = vrot.slane %v277, 2
        %v279 = vadd.f32 %v277, %v278
        %v280 = vrot.slane %v279, 1
        %v281 = vadd.f32 %v279, %v280
        %s282 = vtos %v281
        %s283 = smul.f32 %s230, %s254
        %s284 = smul.f32 %s242, %s242
        %s285 = ssub.f32 %s283, %s284
        %p286 = scmp.gt.f32.partialorder %s285, 0.0
        %s287 = scalar_select %p286, %s285, 1.0
        %s288 = smul.f32 %s254, %s268
        %s289 = smul.f32 %s242, %s282
        %s290 = ssub.f32 %s288, %s289
        %v291 = vstv %s287
        %v292 = vrcp.pop %v291
        %s293 = vtos %v292
        %s294 = smul.f32 %s290, %s293
        %s295 = scalar_select %p286, %s294, 0.0
        %s296 = smul.f32 %s230, %s282
        %s297 = smul.f32 %s242, %s268
        %s298 = ssub.f32 %s296, %s297
        %v299 = vstv %s287
        %v300 = vrcp.pop %v299
        %s301 = vtos %v300
        %s302 = smul.f32 %s298, %s301
        %s303 = scalar_select %p286, %s302, 0.0
        %v304 = vstv %s295
        %v305 = vmul.f32 %v304, %v204
        %v306 = vmul.f32 %v304, %v205
        %v307 = vstv %s303
        %v308 = vadd.f32 %v305, %v307
        %v309 = vadd.f32 %v306, %v307
        %v310 = vsub.f32 %v308, %v206
        %v311 = vsub.f32 %v309, %v207
        %v312 = vmul.f32 %v212, %v310
        %v313 = vmul.f32 %v213, %v311
        %v314 = vmul.f32 %v312, %v310
        %v315 = vmul.f32 %v313, %v311
        %v316 = vsel %vm218, %v314, 0.0
        %v317 = vsel %vm218, %v315, 0.0
        %v318 = vadd.f32 %v316, %v317
        %319 = vadd.xlane.f32.xlu0 %v318
        %v320 = vpop.xlane.xlu0 %319
        %v321 = vrot.slane %v320, 4
        %v322 = vadd.f32 %v320, %v321
        %v323 = vrot.slane %v322, 2
        %v324 = vadd.f32 %v322, %v323
        %v325 = vrot.slane %v324, 1
        %v326 = vadd.f32 %v324, %v325
        %s327 = vtos %v326
        %328 = vst.msk [vmem:[#allocation2] sm:$0xff] %vm218, %v312
        %329 = vst.msk [vmem:[#allocation2 + $0x8] sm:$0xff] %vm218, %v313
        %330 = vst.msk [vmem:[#allocation3] sm:$0xff] %vm218, %v212
        %331 = vst.msk [vmem:[#allocation3 + $0x8] sm:$0xff] %vm218, %v213
        %v332 = vlaneseq
        %v333 = vand.u32 %v332, 127
        %336 = vrot.lane.b32.xlu0 %v312, 1
        %v337 = vpop.permute.xlu0 %336
        %338 = vrot.lane.b32.xlu0 %v313, 1
        %v339 = vpop.permute.xlu0 %338
        %v342 = vsub.f32 %v312, %v337
        %v343 = vsub.f32 %v313, %v339
        %v344 = vand.u32 2147483647, %v342
        %v345 = vand.u32 2147483647, %v343
        %348 = vrot.lane.b32.xlu0 %v212, 1
        %v349 = vpop.permute.xlu0 %348
        %350 = vrot.lane.b32.xlu0 %v213, 1
        %v351 = vpop.permute.xlu0 %350
        %v354 = vmul.f32 %v344, %v349
        %v355 = vmul.f32 %v345, %v351
        %v356 = vmul.f32 %v354, %v212
        %v357 = vmul.f32 %v355, %v213
        %360 = vrot.lane.b32.xlu0 %v356, 127
        %v361 = vpop.permute.xlu0 %360
        %362 = vrot.lane.b32.xlu0 %v357, 127
        %v363 = vpop.permute.xlu0 %362
        %vm366 = vcmask 121856
        %v367 = vsel %vm366, %v361, 0.0
        %v368 = vsel %vm366, %v363, 0.0
        %v369 = vadd.f32 %v367, %v368
        %370 = vadd.xlane.f32.xlu0 %v369
        %v371 = vpop.xlane.xlu0 %370
        %v372 = vrot.slane %v371, 4
        %v373 = vadd.f32 %v371, %v372
        %v374 = vrot.slane %v373, 2
        %v375 = vadd.f32 %v373, %v374
        %v376 = vrot.slane %v375, 1
        %v377 = vadd.f32 %v375, %v376
        %s378 = vtos %v377
        %s379 = sadd.f32 %s378, 0.0
        %vm380 = vcmask 1040384
        %v381 = vrot.slane %v312, 7
        %v382 = vrot.slane %v313, 7
        %v383 = vsel %vm380, %v381, %v382
        %v386 = vsub.f32 %v312, %v381
        %v387 = vsub.f32 %v313, %v383
        %v388 = vand.u32 2147483647, %v386
        %v389 = vand.u32 2147483647, %v387
        %v390 = vrot.slane %v212, 7
        %v391 = vrot.slane %v213, 7
        %v392 = vsel %vm380, %v390, %v391
        %v395 = vmul.f32 %v388, %v390
        %v396 = vmul.f32 %v389, %v392
        %v397 = vmul.f32 %v395, %v212
        %v398 = vmul.f32 %v396, %v213
        %vm401 = vcmask 1046528
        %v402 = vrot.slane %v397, 1
        %v403 = vrot.slane %v398, 1
        %v404 = vsel %vm401, %v402, %v403
        %v407 = vsel %vm218, %v404, 0.0
        %vm408 = vcmask 129024
        %v409 = vsel %vm408, %v403, 0.0
        %v410 = vadd.f32 %v407, %v409
        %411 = vadd.xlane.f32.xlu0 %v410
        %v412 = vpop.xlane.xlu0 %411
        %v413 = vrot.slane %v412, 4
        %v414 = vadd.f32 %v412, %v413
        %v415 = vrot.slane %v414, 2
        %v416 = vadd.f32 %v414, %v415
        %v417 = vrot.slane %v416, 1
        %v418 = vadd.f32 %v416, %v417
        %s419 = vtos %v418
        %s420 = sadd.f32 %s379, %s419
        %v421 = vld [vmem:[#allocation2] ss:$2 sm:$0xff]
        %v422 = vld [vmem:[#allocation3] ss:$2 sm:$0xff]
        %v423 = vand.u32 %v333, 1
        %vm424 = vcmp.eq.s32.totalorder %v423, 0
        %v425 = vsel %vm424, 1, 0
        %v426 = vcvt.s32.f32 %v425
        %v427 = vmul.f32 %v422, %v426
        %v428 = vsel %vm218, %v427, 0.0
        %429 = vadd.xlane.f32.xlu0 %v428
        %v430 = vpop.xlane.xlu0 %429
        %v431 = vrot.slane %v430, 4
        %v432 = vadd.f32 %v430, %v431
        %v433 = vrot.slane %v432, 2
        %v434 = vadd.f32 %v432, %v433
        %v435 = vrot.slane %v434, 1
        %v436 = vadd.f32 %v434, %v435
        %s437 = vtos %v436
        %439 = vrot.lane.b32.xlu0 %v421, 2
        %v440 = vpop.permute.xlu0 %439
        %v442 = vsub.f32 %v421, %v440
        %v443 = vand.u32 2147483647, %v442
        %445 = vrot.lane.b32.xlu0 %v422, 2
        %v446 = vpop.permute.xlu0 %445
        %v448 = vmul.f32 %v443, %v446
        %v449 = vmul.f32 %v448, %v422
        %451 = vrot.lane.b32.xlu0 %v426, 2
        %v452 = vpop.permute.xlu0 %451
        %v454 = vmul.f32 %v449, %v452
        %456 = vrot.lane.b32.xlu0 %v454, 126
        %v457 = vpop.permute.xlu0 %456
        %vm459 = vcmask 113664
        %v460 = vsel %vm459, %v457, 0.0
        %461 = vadd.xlane.f32.xlu0 %v460
        %v462 = vpop.xlane.xlu0 %461
        %v463 = vrot.slane %v462, 4
        %v464 = vadd.f32 %v462, %v463
        %v465 = vrot.slane %v464, 2
        %v466 = vadd.f32 %v464, %v465
        %v467 = vrot.slane %v466, 1
        %v468 = vadd.f32 %v466, %v467
        %s469 = vtos %v468
        %s470 = sadd.f32 %s469, 0.0
        %v471 = vrot.slane %v421, 7
        %v473 = vsub.f32 %v421, %v471
        %v474 = vand.u32 2147483647, %v473
        %v475 = vrot.slane %v422, 7
        %v477 = vmul.f32 %v474, %v475
        %v478 = vmul.f32 %v477, %v422
        %v479 = vmul.f32 %v478, %v426
        %v481 = vrot.slane %v479, 1
        %v483 = vsel %vm408, %v481, 0.0
        %484 = vadd.xlane.f32.xlu0 %v483
        %v485 = vpop.xlane.xlu0 %484
        %v486 = vrot.slane %v485, 4
        %v487 = vadd.f32 %v485, %v486
        %v488 = vrot.slane %v487, 2
        %v489 = vadd.f32 %v487, %v488
        %v490 = vrot.slane %v489, 1
        %v491 = vadd.f32 %v489, %v490
        %s492 = vtos %v491
        %s493 = sadd.f32 %s470, %s492
        %v494 = vld [vmem:[#allocation2] ss:$4 sm:$0xf]
        %v495 = vld [vmem:[#allocation3] ss:$4 sm:$0xf]
        %v496 = vand.u32 %v333, 3
        %vm497 = vcmp.eq.s32.totalorder %v496, 0
        %v498 = vsel %vm497, 1, 0
        %v499 = vcvt.s32.f32 %v498
        %v500 = vmul.f32 %v495, %v499
        %vm501 = vcmask 125952
        %v502 = vsel %vm501, %v500, 0.0
        %503 = vadd.xlane.f32.xlu0 %v502
        %v504 = vpop.xlane.xlu0 %503
        %v505 = vrot.slane %v504, 4
        %v506 = vadd.f32 %v504, %v505
        %v507 = vrot.slane %v506, 2
        %v508 = vadd.f32 %v506, %v507
        %v509 = vrot.slane %v508, 1
        %v510 = vadd.f32 %v508, %v509
        %s511 = vtos %v510
        %513 = vrot.lane.b32.xlu0 %v494, 4
        %v514 = vpop.permute.xlu0 %513
        %v516 = vsub.f32 %v494, %v514
        %v517 = vand.u32 2147483647, %v516
        %519 = vrot.lane.b32.xlu0 %v495, 4
        %v520 = vpop.permute.xlu0 %519
        %v522 = vmul.f32 %v517, %v520
        %v523 = vmul.f32 %v522, %v495
        %525 = vrot.lane.b32.xlu0 %v499, 4
        %v526 = vpop.permute.xlu0 %525
        %v528 = vmul.f32 %v523, %v526
        %530 = vrot.lane.b32.xlu0 %v528, 124
        %v531 = vpop.permute.xlu0 %530
        %vm533 = vcmask 93184
        %v534 = vsel %vm533, %v531, 0.0
        %535 = vadd.xlane.f32.xlu0 %v534
        %v536 = vpop.xlane.xlu0 %535
        %v537 = vrot.slane %v536, 4
        %v538 = vadd.f32 %v536, %v537
        %v539 = vrot.slane %v538, 2
        %v540 = vadd.f32 %v538, %v539
        %v541 = vrot.slane %v540, 1
        %v542 = vadd.f32 %v540, %v541
        %s543 = vtos %v542
        %s544 = sadd.f32 %s543, 0.0
        %v545 = vrot.slane %v494, 7
        %v547 = vsub.f32 %v494, %v545
        %v548 = vand.u32 2147483647, %v547
        %v549 = vrot.slane %v495, 7
        %v551 = vmul.f32 %v548, %v549
        %v552 = vmul.f32 %v551, %v495
        %v553 = vmul.f32 %v552, %v499
        %v555 = vrot.slane %v553, 1
        %vm557 = vcmask 124928
        %v558 = vsel %vm557, %v555, 0.0
        %559 = vadd.xlane.f32.xlu0 %v558
        %v560 = vpop.xlane.xlu0 %559
        %v561 = vrot.slane %v560, 4
        %v562 = vadd.f32 %v560, %v561
        %v563 = vrot.slane %v562, 2
        %v564 = vadd.f32 %v562, %v563
        %v565 = vrot.slane %v564, 1
        %v566 = vadd.f32 %v564, %v565
        %s567 = vtos %v566
        %s568 = sadd.f32 %s544, %s567
        %v569 = vld [vmem:[#allocation2] ss:$8 sm:$0x3]
        %v570 = vld [vmem:[#allocation3] ss:$8 sm:$0x3]
        %v571 = vand.u32 %v333, 7
        %vm572 = vcmp.eq.s32.totalorder %v571, 0
        %v573 = vsel %vm572, 1, 0
        %v574 = vcvt.s32.f32 %v573
        %v575 = vmul.f32 %v570, %v574
        %vm576 = vcmask 123904
        %v577 = vsel %vm576, %v575, 0.0
        %578 = vadd.xlane.f32.xlu0 %v577
        %v579 = vpop.xlane.xlu0 %578
        %v580 = vrot.slane %v579, 4
        %v581 = vadd.f32 %v579, %v580
        %v582 = vrot.slane %v581, 2
        %v583 = vadd.f32 %v581, %v582
        %v584 = vrot.slane %v583, 1
        %v585 = vadd.f32 %v583, %v584
        %s586 = vtos %v585
        %588 = vrot.lane.b32.xlu0 %v569, 8
        %v589 = vpop.permute.xlu0 %588
        %v591 = vsub.f32 %v569, %v589
        %v592 = vand.u32 2147483647, %v591
        %594 = vrot.lane.b32.xlu0 %v570, 8
        %v595 = vpop.permute.xlu0 %594
        %v597 = vmul.f32 %v592, %v595
        %v598 = vmul.f32 %v597, %v570
        %600 = vrot.lane.b32.xlu0 %v574, 8
        %v601 = vpop.permute.xlu0 %600
        %v603 = vmul.f32 %v598, %v601
        %605 = vrot.lane.b32.xlu0 %v603, 120
        %v606 = vpop.permute.xlu0 %605
        %vm608 = vcmask 58368
        %v609 = vsel %vm608, %v606, 0.0
        %610 = vadd.xlane.f32.xlu0 %v609
        %v611 = vpop.xlane.xlu0 %610
        %v612 = vrot.slane %v611, 4
        %v613 = vadd.f32 %v611, %v612
        %v614 = vrot.slane %v613, 2
        %v615 = vadd.f32 %v613, %v614
        %v616 = vrot.slane %v615, 1
        %v617 = vadd.f32 %v615, %v616
        %s618 = vtos %v617
        %s619 = sadd.f32 %s618, 0.0
        %v620 = vrot.slane %v569, 7
        %v622 = vsub.f32 %v569, %v620
        %v623 = vand.u32 2147483647, %v622
        %v624 = vrot.slane %v570, 7
        %v626 = vmul.f32 %v623, %v624
        %v627 = vmul.f32 %v626, %v570
        %v628 = vmul.f32 %v627, %v574
        %v630 = vrot.slane %v628, 1
        %vm632 = vcmask 122880
        %v633 = vsel %vm632, %v630, 0.0
        %634 = vadd.xlane.f32.xlu0 %v633
        %v635 = vpop.xlane.xlu0 %634
        %v636 = vrot.slane %v635, 4
        %v637 = vadd.f32 %v635, %v636
        %v638 = vrot.slane %v637, 2
        %v639 = vadd.f32 %v637, %v638
        %v640 = vrot.slane %v639, 1
        %v641 = vadd.f32 %v639, %v640
        %s642 = vtos %v641
        %s643 = sadd.f32 %s619, %s642
        %v644 = vlaneseq
        %v645 = vshrl.u32 %v644, 7
        %v646 = vadd.s32 %v645, 8
        %vm647 = vcmp.eq.s32.totalorder %v645, 0
        %vm648 = vcmp.eq.s32.totalorder %v646, 0
        %v649 = vstv %s327
        %v650 = vsel %vm647, %v649, 0.0
        %v651 = vsel %vm648, %v649, 0.0
        %vm652 = vcmp.eq.s32.totalorder %v645, 9
        %vm653 = vcmp.eq.s32.totalorder %v646, 9
        %v654 = vstv %s254
        %v655 = vsel %vm652, %v654, 0.0
        %v656 = vsel %vm653, %v654, 0.0
        %v657 = vadd.f32 %v650, %v655
        %v658 = vadd.f32 %v651, %v656
        %vm659 = vcmp.eq.s32.totalorder %v645, 1
        %vm660 = vcmp.eq.s32.totalorder %v646, 1
        %v661 = vstv %s420
        %v662 = vsel %vm659, %v661, 0.0
        %v663 = vsel %vm660, %v661, 0.0
        %v664 = vadd.f32 %v657, %v662
        %v665 = vadd.f32 %v658, %v663
        %vm666 = vcmp.eq.s32.totalorder %v645, 5
        %vm667 = vcmp.eq.s32.totalorder %v646, 5
        %v668 = vsel %vm666, %v654, 0.0
        %v669 = vsel %vm667, %v654, 0.0
        %v670 = vadd.f32 %v664, %v668
        %v671 = vadd.f32 %v665, %v669
        %vm672 = vcmp.eq.s32.totalorder %v645, 2
        %vm673 = vcmp.eq.s32.totalorder %v646, 2
        %v674 = vstv %s493
        %v675 = vsel %vm672, %v674, 0.0
        %v676 = vsel %vm673, %v674, 0.0
        %v677 = vadd.f32 %v670, %v675
        %v678 = vadd.f32 %v671, %v676
        %vm679 = vcmp.eq.s32.totalorder %v645, 6
        %vm680 = vcmp.eq.s32.totalorder %v646, 6
        %v681 = vstv %s437
        %v682 = vsel %vm679, %v681, 0.0
        %v683 = vsel %vm680, %v681, 0.0
        %v684 = vadd.f32 %v677, %v682
        %v685 = vadd.f32 %v678, %v683
        %vm686 = vcmp.eq.s32.totalorder %v645, 3
        %vm687 = vcmp.eq.s32.totalorder %v646, 3
        %v688 = vstv %s568
        %v689 = vsel %vm686, %v688, 0.0
        %v690 = vsel %vm687, %v688, 0.0
        %v691 = vadd.f32 %v684, %v689
        %v692 = vadd.f32 %v685, %v690
        %vm693 = vcmp.eq.s32.totalorder %v645, 7
        %vm694 = vcmp.eq.s32.totalorder %v646, 7
        %v695 = vstv %s511
        %v696 = vsel %vm693, %v695, 0.0
        %v697 = vsel %vm694, %v695, 0.0
        %v698 = vadd.f32 %v691, %v696
        %v699 = vadd.f32 %v692, %v697
        %vm700 = vcmp.eq.s32.totalorder %v645, 4
        %vm701 = vcmp.eq.s32.totalorder %v646, 4
        %v702 = vstv %s643
        %v703 = vsel %vm700, %v702, 0.0
        %v704 = vsel %vm701, %v702, 0.0
        %v705 = vadd.f32 %v698, %v703
        %v706 = vadd.f32 %v699, %v704
        %vm707 = vcmp.eq.s32.totalorder %v645, 8
        %vm708 = vcmp.eq.s32.totalorder %v646, 8
        %v709 = vstv %s586
        %v710 = vsel %vm707, %v709, 0.0
        %v711 = vsel %vm708, %v709, 0.0
        %v712 = vadd.f32 %v705, %v710
        %v713 = vadd.f32 %v706, %v711
        %714 = vst [vmem:[%s203] sm:$0xff] %v712
        %715 = vst [vmem:[%s203 + $0x8] sm:$0xff] %v713
        %p716 = scmp.lt.s32.totalorder %s19, 1
        %s717 = scalar_select %p716, %s19, 1
        %s718 = smul.addr %s717, 2
        %s719 = smul.addr %s718, 8
        %s720 = scalar_lea.vmem %s2, %s719
        // Predicated region
        $region37: #{midas_loss.1} parent=27 // pred_check
          %p721 = pneg %p89
        $region38: #{midas_loss.1} parent=27 // pred_check_branch
          %723 = sbr.rel (%p721) target = $region40
        $region39: #{midas_loss.1} parent=27 // pred_region
          _
        $region40: #{midas_loss.1} parent=27 // pred_fallthru
          _
      $region28: #{midas_loss.1} parent=5 // pred_fallthru
        _
      %p724 = scmp.le.s32.totalorder 2, %s14
      // Predicated region
      $region41: #{midas_loss.1} parent=5 // pred_check
        %p725 = pneg %p724
      $region42: #{midas_loss.1} parent=5 // pred_check_branch
        %727 = sbr.rel (%p725) target = $region44
      $region43: #{midas_loss.1} parent=5 // pred_region
        %s728 = ssub.s32 %s14, 2
        // Predicated region
        $region45: #{midas_loss.1} parent=43 // pred_check
          %p729 = pneg %p95
        $region46: #{midas_loss.1} parent=43 // pred_check_branch
          %731 = sbr.rel (%p729) target = $region48
        $region47: #{midas_loss.1} parent=43 // pred_region
          %p732 = scmp.lt.s32.totalorder %s20, 1
          %s733 = scalar_select %p732, %s20, 1
          %s734 = smul.addr %s733, 2
          %s735 = smul.addr %s734, 8
          %s736 = scalar_lea.vmem %s2, %s735
        $region48: #{midas_loss.1} parent=43 // pred_fallthru
          _
      $region44: #{midas_loss.1} parent=5 // pred_fallthru
        _
    $region6: #{midas_loss.1} parent=1 // loop_footer
      %s18 = sadd.s32 1, %s14
    $region7: #{midas_loss.1} parent=1 // loop_footer_branch
      %13 = sbr.rel target = $region3
    $region8: #{midas_loss.1} parent=1 // loop_exit
      _
    %737 = vsyncpa [#allocation5], 1
    %s738 = scalar_lea.sflag [#allocation5], 1
    %739 = vsyncpa %s738, 1
    %740 = vsyncpa [#allocation7], 1
    %s741 = scalar_lea.sflag [#allocation7], 1
    %742 = vsyncpa %s741, 1

</llo_original>
